<compile_context>
chip_gen: v7x
topology: tpu7x:2x2x1
jax: 0.10.0
libtpu: 0.0.40
codegen_flags: <defaults>
</compile_context>

<pallas_src>
import functools
import math

import jax
import jax.numpy as jnp
from jax import lax
from jax.experimental import pallas as pl
from jax.experimental.pallas import tpu as pltpu


_NEG_BIG = -1e30  # effectively -inf for exp() in float32


def _round_up(n, m):
    return ((n + m - 1) // m) * m


def _sinkhorn_kernel(scale_ref, x_ref, yt_ref, cost_ref, pi_ref, c_ref, *,
                     eps, max_iter, thresh, p1, p2, p1p, p2p):
    """One batch element per grid step.

    scale_ref : SMEM (1,) f32      -- 1 / max(C) over the whole (unpadded) batch
    x_ref     : VMEM (1, P1p, D)
    yt_ref    : VMEM (1, D, P2p)   -- y transposed (lane-dense in P2p)
    cost_ref  : VMEM (1, 1, 1)
    pi_ref    : VMEM (1, P1p, P2p)
    c_ref     : VMEM (1, P1p, P2p)
    """
    inv_norm = scale_ref[0]

    x = x_ref[0].astype(jnp.float32)           # (P1p, D)
    yt = yt_ref[0].astype(jnp.float32)         # (D, P2p)

    # ---- cost matrix via Gram expansion (cross term on the MXU) ------------
    xsq = jnp.sum(x * x, axis=-1, keepdims=True)             # (P1p, 1)
    ysq = jnp.sum(yt * yt, axis=-2, keepdims=True)            # (1, P2p)
    xy = jnp.dot(x, yt, preferred_element_type=jnp.float32)   # (P1p, P2p)
    c_norm = jnp.maximum(xsq + ysq - 2.0 * xy, 0.0) * inv_norm

    inv_eps = 1.0 / eps
    neg_c_eps = c_norm * (-inv_eps)            # -C/eps, reused every iteration

    need_row_mask = p1p > p1
    need_col_mask = p2p > p2
    if need_row_mask or need_col_mask:
        rows = lax.broadcasted_iota(jnp.int32, (p1p, p2p), 0)
        cols = lax.broadcasted_iota(jnp.int32, (p1p, p2p), 1)
        valid = jnp.logical_and(rows < p1, cols < p2)
        neg_c_eps = jnp.where(valid, neg_c_eps, _NEG_BIG)
    if need_row_mask:
        row_valid = lax.broadcasted_iota(jnp.int32, (p1p, 1), 0) < p1
    if need_col_mask:
        col_valid = lax.broadcasted_iota(jnp.int32, (1, p2p), 1) < p2

    # Uniform marginals -> compile-time log constants (use unpadded sizes).
    log_mu = math.log(1.0 / p1 + 1e-8)
    log_nu = math.log(1.0 / p2 + 1e-8)
    # err is accumulated on u/eps, so the threshold is rescaled accordingly.
    thresh_scaled = thresh / eps

    def row_lse(m):                            # logsumexp over lanes -> (P1p, 1)
        mx = jnp.max(m, axis=-1, keepdims=True)
        return mx + jnp.log(jnp.sum(jnp.exp(m - mx), axis=-1, keepdims=True))

    def col_lse(m):                            # logsumexp over sublanes -> (1, P2p)
        mx = jnp.max(m, axis=-2, keepdims=True)
        return mx + jnp.log(jnp.sum(jnp.exp(m - mx), axis=-2, keepdims=True))

    # Loop state carries u/eps (P1p, 1) and v/eps (1, P2p):
    #   M(u, v) = -C/eps + u/eps + v/eps  -> each iteration is adds only.
    def cond(carry):
        it, _, _, err = carry
        return jnp.logical_and(it < max_iter, err >= thresh_scaled)

    def body(carry):
        it, u_e, v_e, _ = carry
        m_u = neg_c_eps + (u_e + v_e)
        u_new = (log_mu - row_lse(m_u)) + u_e
        if need_row_mask:
            u_new = jnp.where(row_valid, u_new, 0.0)
        m_v = neg_c_eps + (u_new + v_e)
        v_new = (log_nu - col_lse(m_v)) + v_e
        if need_col_mask:
            v_new = jnp.where(col_valid, v_new, 0.0)
        # NOTE: per-batch stopping criterion sum_i |du_i| < thresh; the torch
        # reference averages this quantity over the batch before breaking, so
        # converged batches differ from the reference by < thresh-scale terms.
        err = jnp.sum(jnp.abs(u_new - u_e))
        return it + 1, u_new, v_new, err

    carry0 = (jnp.array(0, jnp.int32),
              jnp.zeros((p1p, 1), jnp.float32),
              jnp.zeros((1, p2p), jnp.float32),
              jnp.array(jnp.inf, jnp.float32))
    _, u_e, v_e, _ = lax.while_loop(cond, body, carry0)

    pi = jnp.exp(neg_c_eps + (u_e + v_e))      # padded entries -> exp(-1e30) = 0
    cost = jnp.sum(jnp.sum(pi * c_norm, axis=-1, keepdims=True),
                   axis=-2, keepdims=True)     # (1, 1)

    cost_ref[0] = cost
    pi_ref[0] = pi.astype(pi_ref.dtype)
    c_ref[0] = c_norm.astype(c_ref.dtype)


def sinkhorn(x, y, *, eps=0.1, max_iter=100, thresh=1e-3, reduction='none'):
    """JAX/Pallas equivalent of Sinkhorn.forward. Returns (cost, pi, C)."""
    # TODO(synk): eps_parameter=True (trainable eps) would need eps passed as a
    # runtime scalar instead of being baked in as a compile-time constant.
    was_2d = (x.ndim == 2)
    if was_2d:
        if y.ndim != 2:
            raise ValueError("x and y must have the same rank")
        x = x[None]
        y = y[None]
    if x.ndim != 3 or y.ndim != 3:
        raise ValueError("expected inputs of shape (N, P, D) or (P, D)")
    N, P1, D = x.shape
    N2, P2, D2 = y.shape
    assert N == N2 and D == D2

    xf = x.astype(jnp.float32)
    yf = y.astype(jnp.float32)

    # ---- global max(C) pre-pass (plain JAX; one matmul, tiny vs. the loop) --
    # Must run on the UNPADDED tensors: zero-padded points would otherwise
    # contribute spurious ||y_j||^2 / ||x_i||^2 distances to the max.
    xsq = jnp.sum(xf * xf, axis=-1)                        # (N, P1)
    ysq = jnp.sum(yf * yf, axis=-1)                        # (N, P2)
    cross = jnp.einsum('bid,bjd->bij', xf, yf,
                       preferred_element_type=jnp.float32)
    c_max = jnp.max(xsq[:, :, None] + ysq[:, None, :] - 2.0 * cross)
    # Guard against a degenerate all-zero cost matrix (reference would NaN).
    c_max = jnp.where(c_max > 0.0, c_max, 1.0)
    inv_norm = jnp.reshape(1.0 / c_max, (1,)).astype(jnp.float32)

    # ---- lane-dense padding: P1 -> multiple of 8, P2 -> multiple of 128 -----
    P1p = _round_up(P1, 8)
    P2p = _round_up(P2, 128)
    if P1p != P1:
        xf = jnp.pad(xf, ((0, 0), (0, P1p - P1), (0, 0)))
    if P2p != P2:
        yf = jnp.pad(yf, ((0, 0), (0, P2p - P2), (0, 0)))
    yt = jnp.swapaxes(yf, 1, 2)                            # (N, D, P2p)

    kernel = functools.partial(
        _sinkhorn_kernel, eps=float(eps), max_iter=int(max_iter),
        thresh=float(thresh), p1=P1, p2=P2, p1p=P1p, p2p=P2p)

    grid_spec = pltpu.PrefetchScalarGridSpec(
        num_scalar_prefetch=1,                 # 1/max(C) lands in SMEM
        grid=(N,),
        in_specs=[
            pl.BlockSpec((1, P1p, D), lambda b, s: (b, 0, 0)),
            pl.BlockSpec((1, D, P2p), lambda b, s: (b, 0, 0)),
        ],
        out_specs=[
            pl.BlockSpec((1, 1, 1), lambda b, s: (b, 0, 0)),
            pl.BlockSpec((1, P1p, P2p), lambda b, s: (b, 0, 0)),
            pl.BlockSpec((1, P1p, P2p), lambda b, s: (b, 0, 0)),
        ],
    )

    # Advisory cost hint so XLA schedules around the (iteration-heavy) call.
    n_elem = P1p * P2p
    cost_estimate = pl.CostEstimate(
        flops=int(N * (2 * P1p * D * P2p + (max_iter * 10 + 6) * n_elem)),
        transcendentals=int(N * (2 * max_iter + 1) * n_elem),
        bytes_accessed=int(4 * N * (P1p * D + D * P2p + 2 * n_elem + 1)),
    )

    cost3, pi_pad, c_pad = pl.pallas_call(
        kernel,
        grid_spec=grid_spec,
        out_shape=(
            jax.ShapeDtypeStruct((N, 1, 1), jnp.float32),
            jax.ShapeDtypeStruct((N, P1p, P2p), jnp.float32),
            jax.ShapeDtypeStruct((N, P1p, P2p), jnp.float32),
        ),
        compiler_params=pltpu.CompilerParams(
            dimension_semantics=("parallel",),       # multi-TC: batch split
            vmem_limit_bytes=32 * 1024 * 1024,       # explicit (v5e default 16 MiB)
        ),
        cost_estimate=cost_estimate,
    )(inv_norm, xf, yt)
    # NOTE: for very large point counts, tile P1 as a second grid axis to stay
    # within v7x's 64 MiB VMEM; not needed at these block sizes.

    cost = cost3[:, 0, 0]                              # (N,)
    pi = pi_pad if (P1p == P1 and P2p == P2) else pi_pad[:, :P1, :P2]
    C = c_pad if (P1p == P1 and P2p == P2) else c_pad[:, :P1, :P2]
    if was_2d:
        cost = cost[0]
        pi = pi[0]
        C = C[0]
    if reduction == 'mean':
        cost = cost.mean()
    elif reduction == 'sum':
        cost = cost.sum()
    return cost, pi, C


if __name__ == "__main__":
    key = jax.random.PRNGKey(0)
    kx, ky = jax.random.split(key)

    N, P1, P2, D = 2, 12, 16, 8
    x = jax.random.normal(kx, (N, P1, D), dtype=jnp.float32)
    y = jax.random.normal(ky, (N, P2, D), dtype=jnp.float32)

    cost, pi, C = sinkhorn(x, y, eps=0.1, max_iter=100, thresh=1e-3,
                           reduction='none')
    jax.block_until_ready((cost, pi, C))

    assert cost.shape == (N,)
    assert pi.shape == (N, P1, P2)
    assert C.shape == (N, P1, P2)
    assert bool(jnp.all(jnp.isfinite(cost)))
    assert bool(jnp.all(jnp.isfinite(pi))) and bool(jnp.all(pi >= 0.0))
    assert bool(jnp.all(jnp.isfinite(C)))
    # Transport plan marginals should be ~uniform (1/P1 per row, 1/P2 per col).
    row_marg = jnp.sum(pi, axis=-1)
    col_marg = jnp.sum(pi, axis=-2)
    assert bool(jnp.all(jnp.abs(row_marg - 1.0 / P1) < 5e-2))
    assert bool(jnp.all(jnp.abs(col_marg - 1.0 / P2) < 5e-2))
    print("KERNEL_OK")
</pallas_src>

<mosaic_0001>
module attributes {stable_mosaic.version = 11 : i64} {
  func.func @_sinkhorn_kernel(%arg0: i32, %arg1: memref<1xf32, #tpu.memory_space<smem>>, %arg2: memref<1x16x8xf32, #tpu.memory_space<vmem>>, %arg3: memref<1x8x128xf32, #tpu.memory_space<vmem>>, %arg4: memref<1x1x1xf32, #tpu.memory_space<vmem>>, %arg5: memref<1x16x128xf32, #tpu.memory_space<vmem>>, %arg6: memref<1x16x128xf32, #tpu.memory_space<vmem>>) attributes {dimension_semantics = [#tpu.dimension_semantics<parallel>], iteration_bounds = array<i64: 2>, scalar_prefetch = 1 : i64, scratch_operands = 0 : i64, tpu.core_type = #tpu.core_type<tc>, window_params = [{transform_indices = @transform_0, window_bounds = array<i64: 1, 16, 8>}, {transform_indices = @transform_1, window_bounds = array<i64: 1, 8, 128>}, {transform_indices = @transform_2, window_bounds = array<i64: 1, 1, 1>}, {transform_indices = @transform_3, window_bounds = array<i64: 1, 16, 128>}, {transform_indices = @transform_4, window_bounds = array<i64: 1, 16, 128>}]} {
    %c0 = arith.constant 0 : index
    %0 = memref.load %arg1[%c0] : memref<1xf32, #tpu.memory_space<smem>>
    %c0_0 = arith.constant 0 : index
    %c0_1 = arith.constant 0 : index
    %c0_2 = arith.constant 0 : index
    %1 = vector.load %arg2[%c0_0, %c0_1, %c0_2] : memref<1x16x8xf32, #tpu.memory_space<vmem>>, vector<1x16x8xf32>
    %2 = vector.shape_cast %1 : vector<1x16x8xf32> to vector<16x8xf32>
    %c0_3 = arith.constant 0 : index
    %c0_4 = arith.constant 0 : index
    %c0_5 = arith.constant 0 : index
    %3 = vector.load %arg3[%c0_3, %c0_4, %c0_5] : memref<1x8x128xf32, #tpu.memory_space<vmem>>, vector<1x8x128xf32>
    %4 = vector.shape_cast %3 : vector<1x8x128xf32> to vector<8x128xf32>
    %5 = arith.mulf %2, %2 : vector<16x8xf32>
    %cst = arith.constant dense<0.000000e+00> : vector<16xf32>
    %6 = vector.multi_reduction <add>, %5, %cst [1] : vector<16x8xf32> to vector<16xf32>
    %7 = vector.shape_cast %6 : vector<16xf32> to vector<16x1xf32>
    %8 = arith.mulf %4, %4 : vector<8x128xf32>
    %cst_6 = arith.constant dense<0.000000e+00> : vector<128xf32>
    %9 = vector.multi_reduction <add>, %8, %cst_6 [0] : vector<8x128xf32> to vector<128xf32>
    %10 = vector.shape_cast %9 : vector<128xf32> to vector<1x128xf32>
    %cst_7 = arith.constant dense<0.000000e+00> : vector<16x128xf32>
    %11 = tpu.matmul %2, %4, %cst_7 {dimension_numbers = #tpu.dot_dimension_numbers<[1], [0], [0], [1], [0, 0, 1, 1], [], []>} : vector<16x8xf32>, vector<8x128xf32>, vector<16x128xf32> -> vector<16x128xf32>
    %12 = vector.broadcast %7 : vector<16x1xf32> to vector<16x128xf32>
    %13 = vector.broadcast %10 : vector<1x128xf32> to vector<16x128xf32>
    %14 = arith.addf %12, %13 : vector<16x128xf32>
    %cst_8 = arith.constant 2.000000e+00 : f32
    %15 = vector.broadcast %cst_8 : f32 to vector<16x128xf32>
    %16 = arith.mulf %15, %11 : vector<16x128xf32>
    %17 = arith.subf %14, %16 : vector<16x128xf32>
    %cst_9 = arith.constant 0.000000e+00 : f32
    %18 = vector.broadcast %cst_9 : f32 to vector<16x128xf32>
    %19 = arith.maximumf %17, %18 : vector<16x128xf32>
    %20 = vector.broadcast %0 : f32 to vector<16x128xf32>
    %21 = arith.mulf %19, %20 : vector<16x128xf32>
    %cst_10 = arith.constant -1.000000e+01 : f32
    %22 = vector.broadcast %cst_10 : f32 to vector<16x128xf32>
    %23 = arith.mulf %21, %22 : vector<16x128xf32>
    %24 = tpu.iota {dimensions = array<i32: 0>} : vector<16x128xi32>
    %25 = tpu.iota {dimensions = array<i32: 1>} : vector<16x128xi32>
    %c12_i32 = arith.constant 12 : i32
    %26 = vector.broadcast %c12_i32 : i32 to vector<16x128xi32>
    %27 = arith.cmpi slt, %24, %26 : vector<16x128xi32>
    %c16_i32 = arith.constant 16 : i32
    %28 = vector.broadcast %c16_i32 : i32 to vector<16x128xi32>
    %29 = arith.cmpi slt, %25, %28 : vector<16x128xi32>
    %30 = arith.andi %27, %29 : vector<16x128xi1>
    %cst_11 = arith.constant -1.000000e+30 : f32
    %31 = vector.broadcast %cst_11 : f32 to vector<16x128xf32>
    %32 = arith.select %30, %23, %31 : vector<16x128xi1>, vector<16x128xf32>
    %33 = tpu.iota {dimensions = array<i32: 0>} : vector<16x1xi32>
    %c12_i32_12 = arith.constant 12 : i32
    %34 = vector.broadcast %c12_i32_12 : i32 to vector<16x1xi32>
    %35 = arith.cmpi slt, %33, %34 : vector<16x1xi32>
    %36 = tpu.iota {dimensions = array<i32: 1>} : vector<1x128xi32>
    %c16_i32_13 = arith.constant 16 : i32
    %37 = vector.broadcast %c16_i32_13 : i32 to vector<1x128xi32>
    %38 = arith.cmpi slt, %36, %37 : vector<1x128xi32>
    %cst_14 = arith.constant 0.000000e+00 : f32
    %39 = vector.broadcast %cst_14 : f32 to vector<16x1xf32>
    %cst_15 = arith.constant 0.000000e+00 : f32
    %40 = vector.broadcast %cst_15 : f32 to vector<1x128xf32>
    %c0_i32 = arith.constant 0 : i32
    %cst_16 = arith.constant 0x7F800000 : f32
    %41:4 = scf.while (%arg7 = %c0_i32, %arg8 = %39, %arg9 = %40, %arg10 = %cst_16) : (i32, vector<16x1xf32>, vector<1x128xf32>, f32) -> (i32, vector<16x1xf32>, vector<1x128xf32>, f32) {
      %c100_i32 = arith.constant 100 : i32
      %61 = arith.cmpi slt, %arg7, %c100_i32 : i32
      %cst_28 = arith.constant 0.00999999977 : f32
      %62 = arith.cmpf oge, %arg10, %cst_28 : f32
      %63 = arith.andi %61, %62 : i1
      scf.condition(%63) %arg7, %arg8, %arg9, %arg10 : i32, vector<16x1xf32>, vector<1x128xf32>, f32
    } do {
    ^bb0(%arg7: i32, %arg8: vector<16x1xf32>, %arg9: vector<1x128xf32>, %arg10: f32):
      %61 = vector.broadcast %arg8 : vector<16x1xf32> to vector<16x128xf32>
      %62 = vector.broadcast %arg9 : vector<1x128xf32> to vector<16x128xf32>
      %63 = arith.addf %61, %62 : vector<16x128xf32>
      %64 = arith.addf %32, %63 : vector<16x128xf32>
      %cst_28 = arith.constant dense<0xFF800000> : vector<16xf32>
      %65 = vector.multi_reduction <maximumf>, %64, %cst_28 [1] : vector<16x128xf32> to vector<16xf32>
      %66 = vector.shape_cast %65 : vector<16xf32> to vector<16x1xf32>
      %67 = vector.broadcast %66 : vector<16x1xf32> to vector<16x128xf32>
      %68 = arith.subf %64, %67 : vector<16x128xf32>
      %69 = math.exp %68 : vector<16x128xf32>
      %cst_29 = arith.constant dense<0.000000e+00> : vector<16xf32>
      %70 = vector.multi_reduction <add>, %69, %cst_29 [1] : vector<16x128xf32> to vector<16xf32>
      %71 = vector.shape_cast %70 : vector<16xf32> to vector<16x1xf32>
      %72 = math.log %71 : vector<16x1xf32>
      %73 = arith.addf %66, %72 : vector<16x1xf32>
      %cst_30 = arith.constant -2.48490644 : f32
      %74 = vector.broadcast %cst_30 : f32 to vector<16x1xf32>
      %75 = arith.subf %74, %73 : vector<16x1xf32>
      %76 = arith.addf %75, %arg8 : vector<16x1xf32>
      %cst_31 = arith.constant 0.000000e+00 : f32
      %77 = vector.broadcast %cst_31 : f32 to vector<16x1xf32>
      %78 = arith.select %35, %76, %77 : vector<16x1xi1>, vector<16x1xf32>
      %79 = vector.broadcast %78 : vector<16x1xf32> to vector<16x128xf32>
      %80 = vector.broadcast %arg9 : vector<1x128xf32> to vector<16x128xf32>
      %81 = arith.addf %79, %80 : vector<16x128xf32>
      %82 = arith.addf %32, %81 : vector<16x128xf32>
      %cst_32 = arith.constant dense<0xFF800000> : vector<128xf32>
      %83 = vector.multi_reduction <maximumf>, %82, %cst_32 [0] : vector<16x128xf32> to vector<128xf32>
      %84 = vector.shape_cast %83 : vector<128xf32> to vector<1x128xf32>
      %85 = vector.broadcast %84 : vector<1x128xf32> to vector<16x128xf32>
      %86 = arith.subf %82, %85 : vector<16x128xf32>
      %87 = math.exp %86 : vector<16x128xf32>
      %cst_33 = arith.constant dense<0.000000e+00> : vector<128xf32>
      %88 = vector.multi_reduction <add>, %87, %cst_33 [0] : vector<16x128xf32> to vector<128xf32>
      %89 = vector.shape_cast %88 : vector<128xf32> to vector<1x128xf32>
      %90 = math.log %89 : vector<1x128xf32>
      %91 = arith.addf %84, %90 : vector<1x128xf32>
      %cst_34 = arith.constant -2.77258849 : f32
      %92 = vector.broadcast %cst_34 : f32 to vector<1x128xf32>
      %93 = arith.subf %92, %91 : vector<1x128xf32>
      %94 = arith.addf %93, %arg9 : vector<1x128xf32>
      %cst_35 = arith.constant 0.000000e+00 : f32
      %95 = vector.broadcast %cst_35 : f32 to vector<1x128xf32>
      %96 = arith.select %38, %94, %95 : vector<1x128xi1>, vector<1x128xf32>
      %97 = arith.subf %78, %arg8 : vector<16x1xf32>
      %98 = math.absf %97 : vector<16x1xf32>
      %99 = vector.shape_cast %98 : vector<16x1xf32> to vector<1x16x1xf32>
      %cst_36 = arith.constant dense<0.000000e+00> : vector<1xf32>
      %100 = vector.multi_reduction <add>, %99, %cst_36 [1, 2] : vector<1x16x1xf32> to vector<1xf32>
      %101 = vector.shape_cast %100 : vector<1xf32> to vector<1x1x1xf32>
      %102 = vector.extract %101[0, 0, 0] : f32 from vector<1x1x1xf32>
      %c1_i32 = arith.constant 1 : i32
      %103 = arith.addi %arg7, %c1_i32 : i32
      scf.yield %103, %78, %96, %102 : i32, vector<16x1xf32>, vector<1x128xf32>, f32
    }
    %42 = vector.broadcast %41#1 : vector<16x1xf32> to vector<16x128xf32>
    %43 = vector.broadcast %41#2 : vector<1x128xf32> to vector<16x128xf32>
    %44 = arith.addf %42, %43 : vector<16x128xf32>
    %45 = arith.addf %32, %44 : vector<16x128xf32>
    %46 = math.exp %45 : vector<16x128xf32>
    %47 = arith.mulf %46, %21 : vector<16x128xf32>
    %cst_17 = arith.constant dense<0.000000e+00> : vector<16xf32>
    %48 = vector.multi_reduction <add>, %47, %cst_17 [1] : vector<16x128xf32> to vector<16xf32>
    %49 = vector.shape_cast %48 : vector<16xf32> to vector<16x1xf32>
    %cst_18 = arith.constant dense<0.000000e+00> : vector<1xf32>
    %50 = vector.multi_reduction <add>, %49, %cst_18 [0] : vector<16x1xf32> to vector<1xf32>
    %51 = vector.shape_cast %50 : vector<1xf32> to vector<1x1xf32>
    %c0_19 = arith.constant 0 : index
    %c0_20 = arith.constant 0 : index
    %c0_21 = arith.constant 0 : index
    %52 = vector.load %arg4[%c0_19, %c0_20, %c0_21] : memref<1x1x1xf32, #tpu.memory_space<vmem>>, vector<1x1x1xf32>
    %53 = vector.shape_cast %52 : vector<1x1x1xf32> to vector<1x1xf32>
    %54 = vector.shape_cast %51 : vector<1x1xf32> to vector<1x1x1xf32>
    tpu.vector_store %arg4[%c0_19, %c0_20, %c0_21], %54 {strides = array<i32>} : memref<1x1x1xf32, #tpu.memory_space<vmem>>, vector<1x1x1xf32>,
    %c0_22 = arith.constant 0 : index
    %c0_23 = arith.constant 0 : index
    %c0_24 = arith.constant 0 : index
    %55 = vector.load %arg5[%c0_22, %c0_23, %c0_24] : memref<1x16x128xf32, #tpu.memory_space<vmem>>, vector<1x16x128xf32>
    %56 = vector.shape_cast %55 : vector<1x16x128xf32> to vector<16x128xf32>
    %57 = vector.shape_cast %46 : vector<16x128xf32> to vector<1x16x128xf32>
    tpu.vector_store %arg5[%c0_22, %c0_23, %c0_24], %57 {strides = array<i32>} : memref<1x16x128xf32, #tpu.memory_space<vmem>>, vector<1x16x128xf32>,
    %c0_25 = arith.constant 0 : index
    %c0_26 = arith.constant 0 : index
    %c0_27 = arith.constant 0 : index
    %58 = vector.load %arg6[%c0_25, %c0_26, %c0_27] : memref<1x16x128xf32, #tpu.memory_space<vmem>>, vector<1x16x128xf32>
    %59 = vector.shape_cast %58 : vector<1x16x128xf32> to vector<16x128xf32>
    %60 = vector.shape_cast %21 : vector<16x128xf32> to vector<1x16x128xf32>
    tpu.vector_store %arg6[%c0_25, %c0_26, %c0_27], %60 {strides = array<i32>} : memref<1x16x128xf32, #tpu.memory_space<vmem>>, vector<1x16x128xf32>,
    return
  }
  func.func @transform_0(%arg0: i32, %arg1: memref<1xf32, #tpu.memory_space<smem>>) -> (i32, i32, i32) {
    %c0_i32 = arith.constant 0 : i32
    %c0_i32_0 = arith.constant 0 : i32
    %c0_i32_1 = arith.constant 0 : i32
    return %arg0, %c0_i32, %c0_i32_0 : i32, i32, i32
  }
  func.func @transform_1(%arg0: i32, %arg1: memref<1xf32, #tpu.memory_space<smem>>) -> (i32, i32, i32) {
    %c0_i32 = arith.constant 0 : i32
    %c0_i32_0 = arith.constant 0 : i32
    %c0_i32_1 = arith.constant 0 : i32
    return %arg0, %c0_i32, %c0_i32_0 : i32, i32, i32
  }
  func.func @transform_2(%arg0: i32, %arg1: memref<1xf32, #tpu.memory_space<smem>>) -> (i32, i32, i32) {
    %c0_i32 = arith.constant 0 : i32
    %c0_i32_0 = arith.constant 0 : i32
    %c0_i32_1 = arith.constant 0 : i32
    return %arg0, %c0_i32, %c0_i32_0 : i32, i32, i32
  }
  func.func @transform_3(%arg0: i32, %arg1: memref<1xf32, #tpu.memory_space<smem>>) -> (i32, i32, i32) {
    %c0_i32 = arith.constant 0 : i32
    %c0_i32_0 = arith.constant 0 : i32
    %c0_i32_1 = arith.constant 0 : i32
    return %arg0, %c0_i32, %c0_i32_0 : i32, i32, i32
  }
  func.func @transform_4(%arg0: i32, %arg1: memref<1xf32, #tpu.memory_space<smem>>) -> (i32, i32, i32) {
    %c0_i32 = arith.constant 0 : i32
    %c0_i32_0 = arith.constant 0 : i32
    %c0_i32_1 = arith.constant 0 : i32
    return %arg0, %c0_i32, %c0_i32_0 : i32, i32, i32
  }
}

</mosaic_0001>

<llo_original>
// kernel: tpu_custom_call.1
$region0: #{tpu_custom_call.1}
  #allocation0 [shape = 'u32[]', space=smem, size = 0x4, offset = 0x4, fixed_abs, tag = 'smem constant byte address 0x4 - core index']
  #allocation1 [shape = 'u32[144,128]{1,0:T(1,128)}', space=vmem, size = 0x12000, scoped, tag = 'internal scratch']
  #allocation2 [shape = 's32[1]{0}', space=sflag, size = 0x4, scoped, tag = 'scoped memory for tpu_custom_call.1']
  #allocation3 [shape = 'f32[1]{0:T(128)S(6)}', space=smem, size = 0x200, scoped, tag = 'prefetched SMEM operand 0']
  %s0 = inlined_call_operand.<no memory space> [shape: f32[1], index: 0, kind: input, shape index: {}]
  %s1 = inlined_call_operand.vmem [shape: f32[2,16,8], index: 1, kind: input, shape index: {}]
  %s2 = inlined_call_operand.vmem [shape: f32[2,8,128], index: 2, kind: input, shape index: {}]
  %s3 = inlined_call_operand.vmem [shape: f32[2,1,1], index: 3, kind: output, shape index: {0}]
  %s4 = inlined_call_operand.hbm [shape: f32[2,16,128], index: 4, kind: output, shape index: {1}]
  %s5 = inlined_call_operand.hbm [shape: f32[2,16,128], index: 5, kind: output, shape index: {2}]
  %6 = xla_tuple %s3, %s4, %s5
  %s7 = sld [smem:[#allocation0]]
  $region64: #{tpu_custom_call.1} parent=0
    _
  %s9 = ssub.s32 1, %s7
  %s10 = scalar_select 0, %s9, %s7
  %11 = sst [smem:[#allocation3]] %s0
  $region1: #{tpu_custom_call.1} parent=0
    #allocation4 [shape = 'u8[16384]{0}', space=vmem, size = 0x4000, scoped, tag = 'output window, operand 1']
    #allocation5 [shape = 's32[2]{0}', space=sflag, size = 0x8, scoped, tag = 'scoped memory for tpu_custom_call.1']
    #allocation6 [shape = 'u8[16384]{0}', space=vmem, size = 0x4000, scoped, tag = 'output window, operand 2']
    #allocation7 [shape = 's32[2]{0}', space=sflag, size = 0x8, scoped, tag = 'scoped memory for tpu_custom_call.1']
    %12 = vsyncpa [#allocation5], 0
    %s13 = scalar_lea.sflag [#allocation5], 1
    %14 = vsyncpa %s13, 0
    %15 = vsyncpa [#allocation7], 0
    %s16 = scalar_lea.sflag [#allocation7], 1
    %17 = vsyncpa %s16, 0
    loop: start=0, step=1, limit=4
    $region2: #{tpu_custom_call.1} parent=1 // loop_pre_header
      _
    $region3: #{tpu_custom_call.1} parent=1 // loop_header
      %s19 = sphi 0, %s23
      %p20 = scmp.ge.s32.totalorder %s19, 4
      %s29 = sphi 0, %s31
      %s32 = sphi 0, %s29
      %s33 = sphi 0, %s32
      %s49 = sphi 0, %s33
      %s55 = sphi 0, %s57
      %s58 = sphi 0, %s55
      %s59 = sphi 0, %s58
      %s75 = sphi 0, %s59
      %s81 = sphi 0, %s83
      %s84 = sphi 0, %s81
      %s85 = sphi 0, %s84
      %s101 = sphi 0, %s85
      %s107 = sphi 0, %s109
      %s110 = sphi 0, %s107
      %s111 = sphi 0, %s110
      %s127 = sphi 0, %s111
      %s133 = sphi 0, %s135
      %s136 = sphi 0, %s133
      %s137 = sphi 0, %s136
      %s153 = sphi 0, %s137
    $region4: #{tpu_custom_call.1} parent=1 // loop_header_branch
      %22 = sbr.rel (%p20) target = $region8
    $region5: #{tpu_custom_call.1} parent=1 // loop_body
      %s24 = ssub.s32 %s19, 1
      %s25 = ssub.s32 %s19, 2
      %s26 = sadd.s32 %s19, 1
      %s27 = ssub.s32 %s19, %s26
      %p28 = scmp.eq.s32.totalorder %s27, 0
      %s30 = sadd.s32 %s29, 1
      %s31 = scalar_select %p28, %s29, %s30
      %p34 = pneg %p28
      %p35 = scmp.eq.s32.totalorder %s19, 1
      %p36 = por %p34, %p35
      %p37 = scmp.ne.s32.totalorder %s29, %s32
      %p38 = scmp.eq.s32.totalorder %s19, 0
      %p39 = por %p37, %p38
      %p40 = scmp.ne.s32.totalorder %s29, %s32
      %p41 = scmp.eq.s32.totalorder %s24, 1
      %p42 = por %p40, %p41
      %p43 = scmp.ne.s32.totalorder %s32, %s33
      %p44 = scmp.eq.s32.totalorder %s24, 0
      %p45 = por %p43, %p44
      %p46 = scmp.ne.s32.totalorder %s32, %s33
      %p47 = scmp.eq.s32.totalorder %s25, 1
      %p48 = por %p46, %p47
      %p50 = scmp.ne.s32.totalorder %s33, %s49
      %p51 = scmp.eq.s32.totalorder %s25, 0
      %p52 = por %p50, %p51
      %s53 = ssub.s32 %s19, %s26
      %p54 = scmp.eq.s32.totalorder %s53, 0
      %s56 = sadd.s32 %s55, 1
      %s57 = scalar_select %p54, %s55, %s56
      %p60 = pneg %p54
      %p61 = scmp.eq.s32.totalorder %s19, 1
      %p62 = por %p60, %p61
      %p63 = scmp.ne.s32.totalorder %s55, %s58
      %p64 = scmp.eq.s32.totalorder %s19, 0
      %p65 = por %p63, %p64
      %p66 = scmp.ne.s32.totalorder %s55, %s58
      %p67 = scmp.eq.s32.totalorder %s24, 1
      %p68 = por %p66, %p67
      %p69 = scmp.ne.s32.totalorder %s58, %s59
      %p70 = scmp.eq.s32.totalorder %s24, 0
      %p71 = por %p69, %p70
      %p72 = scmp.ne.s32.totalorder %s58, %s59
      %p73 = scmp.eq.s32.totalorder %s25, 1
      %p74 = por %p72, %p73
      %p76 = scmp.ne.s32.totalorder %s59, %s75
      %p77 = scmp.eq.s32.totalorder %s25, 0
      %p78 = por %p76, %p77
      %s79 = ssub.s32 %s19, %s26
      %p80 = scmp.eq.s32.totalorder %s79, 0
      %s82 = sadd.s32 %s81, 1
      %s83 = scalar_select %p80, %s81, %s82
      %p86 = pneg %p80
      %p87 = scmp.eq.s32.totalorder %s19, 1
      %p88 = por %p86, %p87
      %p89 = scmp.ne.s32.totalorder %s81, %s84
      %p90 = scmp.eq.s32.totalorder %s19, 0
      %p91 = por %p89, %p90
      %p92 = scmp.ne.s32.totalorder %s81, %s84
      %p93 = scmp.eq.s32.totalorder %s24, 1
      %p94 = por %p92, %p93
      %p95 = scmp.ne.s32.totalorder %s84, %s85
      %p96 = scmp.eq.s32.totalorder %s24, 0
      %p97 = por %p95, %p96
      %p98 = scmp.ne.s32.totalorder %s84, %s85
      %p99 = scmp.eq.s32.totalorder %s25, 1
      %p100 = por %p98, %p99
      %p102 = scmp.ne.s32.totalorder %s85, %s101
      %p103 = scmp.eq.s32.totalorder %s25, 0
      %p104 = por %p102, %p103
      %s105 = ssub.s32 %s19, %s26
      %p106 = scmp.eq.s32.totalorder %s105, 0
      %s108 = sadd.s32 %s107, 1
      %s109 = scalar_select %p106, %s107, %s108
      %p112 = pneg %p106
      %p113 = scmp.eq.s32.totalorder %s19, 1
      %p114 = por %p112, %p113
      %p115 = scmp.ne.s32.totalorder %s107, %s110
      %p116 = scmp.eq.s32.totalorder %s19, 0
      %p117 = por %p115, %p116
      %p118 = scmp.ne.s32.totalorder %s107, %s110
      %p119 = scmp.eq.s32.totalorder %s24, 1
      %p120 = por %p118, %p119
      %p121 = scmp.ne.s32.totalorder %s110, %s111
      %p122 = scmp.eq.s32.totalorder %s24, 0
      %p123 = por %p121, %p122
      %p124 = scmp.ne.s32.totalorder %s110, %s111
      %p125 = scmp.eq.s32.totalorder %s25, 1
      %p126 = por %p124, %p125
      %p128 = scmp.ne.s32.totalorder %s111, %s127
      %p129 = scmp.eq.s32.totalorder %s25, 0
      %p130 = por %p128, %p129
      %s131 = ssub.s32 %s19, %s26
      %p132 = scmp.eq.s32.totalorder %s131, 0
      %s134 = sadd.s32 %s133, 1
      %s135 = scalar_select %p132, %s133, %s134
      %p138 = pneg %p132
      %p139 = scmp.eq.s32.totalorder %s19, 1
      %p140 = por %p138, %p139
      %p141 = scmp.ne.s32.totalorder %s133, %s136
      %p142 = scmp.eq.s32.totalorder %s19, 0
      %p143 = por %p141, %p142
      %p144 = scmp.ne.s32.totalorder %s133, %s136
      %p145 = scmp.eq.s32.totalorder %s24, 1
      %p146 = por %p144, %p145
      %p147 = scmp.ne.s32.totalorder %s136, %s137
      %p148 = scmp.eq.s32.totalorder %s24, 0
      %p149 = por %p147, %p148
      %p150 = scmp.ne.s32.totalorder %s136, %s137
      %p151 = scmp.eq.s32.totalorder %s25, 1
      %p152 = por %p150, %p151
      %p154 = scmp.ne.s32.totalorder %s137, %s153
      %p155 = scmp.eq.s32.totalorder %s25, 0
      %p156 = por %p154, %p155
      %p157 = scmp.le.s32.totalorder 1, %s19
      %p158 = scmp.lt.s32.totalorder %s19, 3
      %p159 = pnand %p157, %p158
      %p160 = pneg %p159
      // Predicated region
      $region9: #{tpu_custom_call.1} parent=5 // pred_check
        _
      $region10: #{tpu_custom_call.1} parent=5 // pred_check_branch
        %162 = sbr.rel (%p159) target = $region12
      $region11: #{tpu_custom_call.1} parent=5 // pred_region
        %s163 = ssub.s32 %s19, 1
      $region12: #{tpu_custom_call.1} parent=5 // pred_fallthru
        _
      %p164 = scmp.lt.s32.totalorder %s19, 2
      // Predicated region
      $region13: #{tpu_custom_call.1} parent=5 // pred_check
        %p165 = pneg %p164
      $region14: #{tpu_custom_call.1} parent=5 // pred_check_branch
        %167 = sbr.rel (%p165) target = $region16
      $region15: #{tpu_custom_call.1} parent=5 // pred_region
        // Predicated region
        $region17: #{tpu_custom_call.1} parent=15 // pred_check
          %p168 = pneg %p39
        $region18: #{tpu_custom_call.1} parent=15 // pred_check_branch
          %170 = sbr.rel (%p168) target = $region20
        $region19: #{tpu_custom_call.1} parent=15 // pred_region
          %p171 = scmp.lt.s32.totalorder %s19, 1
          %s172 = scalar_select %p171, %s19, 1
          %s173 = smul.addr %s172, 2
          %s174 = smul.addr %s173, 8
          %s175 = scalar_lea.vmem %s1, %s174
        $region20: #{tpu_custom_call.1} parent=15 // pred_fallthru
          _
        // Predicated region
        $region21: #{tpu_custom_call.1} parent=15 // pred_check
          %p176 = pneg %p65
        $region22: #{tpu_custom_call.1} parent=15 // pred_check_branch
          %178 = sbr.rel (%p176) target = $region24
        $region23: #{tpu_custom_call.1} parent=15 // pred_region
          %p179 = scmp.lt.s32.totalorder %s19, 1
          %s180 = scalar_select %p179, %s19, 1
          %s181 = smul.addr %s180, 8
          %s182 = scalar_lea.vmem %s2, %s181
        $region24: #{tpu_custom_call.1} parent=15 // pred_fallthru
          _
      $region16: #{tpu_custom_call.1} parent=5 // pred_fallthru
        _
      %p183 = scmp.le.s32.totalorder 1, %s19
      %p184 = scmp.lt.s32.totalorder %s19, 3
      %p185 = pnand %p183, %p184
      %p186 = pneg %p185
      // Predicated region
      $region25: #{tpu_custom_call.1} parent=5 // pred_check
        _
      $region26: #{tpu_custom_call.1} parent=5 // pred_check_branch
        %188 = sbr.rel (%p185) target = $region28
      $region27: #{tpu_custom_call.1} parent=5 // pred_region
        %s189 = ssub.s32 %s19, 1
        %p190 = scmp.lt.s32.totalorder %s24, 1
        %s191 = scalar_select %p190, %s24, 1
        %s192 = smul.addr %s191, 2
        %s193 = smul.addr %s192, 8
        %s194 = scalar_lea.vmem %s1, %s193
        %p195 = pneg %p45
        %p196 = pneg %p42
        %p197 = scmp.lt.s32.totalorder %s24, 1
        %s198 = scalar_select %p197, %s24, 1
        %s199 = smul.addr %s198, 8
        %s200 = scalar_lea.vmem %s2, %s199
        %p201 = pneg %p71
        %p202 = pneg %p68
        %p203 = pneg %p97
        %p204 = pneg %p94
        %p205 = scmp.lt.s32.totalorder %s24, 1
        %s206 = scalar_select %p205, %s24, 1
        %s207 = scalar_lea.vmem %s3, %s206
        %p208 = pneg %p123
        %p209 = pneg %p120
        %s210 = sand.u32 %s110, 1
        %s211 = scalar_lea.sflag [#allocation5], %s210
        %s212 = sand.u32 %s110, 1
        %s213 = smul.addr %s212, 16
        %s214 = scalar_lea.vmem [#allocation4], %s213
        %p215 = pneg %p149
        %p216 = pneg %p146
        %s217 = sand.u32 %s136, 1
        %s218 = scalar_lea.sflag [#allocation7], %s217
        %s219 = sand.u32 %s136, 1
        %s220 = smul.addr %s219, 16
        %s221 = scalar_lea.vmem [#allocation6], %s220
        %p222 = scmp.lt.s32.totalorder %s24, 1
        %s223 = scalar_select %p222, %s24, 1
        %s224 = smul.addr %s223, 2
        %s225 = smul.addr %s224, 8
        %s226 = scalar_lea.vmem %s1, %s225
        %p227 = scmp.lt.s32.totalorder %s24, 1
        %s228 = scalar_select %p227, %s24, 1
        %s229 = smul.addr %s228, 8
        %s230 = scalar_lea.vmem %s2, %s229
        %p231 = scmp.lt.s32.totalorder %s24, 1
        %s232 = scalar_select %p231, %s24, 1
        %s233 = scalar_lea.vmem %s3, %s232
        %s234 = sld [smem:[#allocation3]]
        %v235 = vld [vmem:[%s226] sm:$0xff]
        %v236 = vld [vmem:[%s226 + $0x8] sm:$0xff]
        %v237 = vld [vmem:[%s230] sm:$0xff]
        %v238 = vmul.f32 %v235, %v235
        %v239 = vmul.f32 %v236, %v236
        %vm240 = vcmask 64512
        %v241 = vsel %vm240, %v238, 0.0
        %242 = vadd.xlane.f32.xlu0 %v241
        %v243 = vpop.xlane.xlu0 %242
        %v244 = vsel %vm240, %v239, 0.0
        %245 = vadd.xlane.f32.xlu0 %v244
        %v246 = vpop.xlane.xlu0 %245
        %v247 = vmul.f32 %v237, %v237
        %v248 = vrot.slane %v247, 4
        %v249 = vadd.f32 %v247, %v248
        %v250 = vrot.slane %v249, 2
        %v251 = vadd.f32 %v249, %v250
        %v252 = vrot.slane %v251, 1
        %v253 = vadd.f32 %v251, %v252
        %v255 = vsel %vm240, %v235, 0
        %v258 = vsel %vm240, %v236, 0
        %260 = vmatprep.subr.mxu0 0.0
        %261 = vmatpush1.msra.mxu0 %v237
        %262 = vmatprep.subr.mxu0 0.0
        %263 = vmatpush1.msra.mxu0 0.0
        %264 = vmatprep.subr.mxu0 0.0
        %265 = vmatpush1.msra.mxu0 0.0
        %266 = vmatprep.subr.mxu0 0.0
        %267 = vmatpush1.msra.mxu0 0.0
        %268 = vmatprep.subr.mxu0 0.0
        %269 = vmatpush1.msra.mxu0 0.0
        %270 = vmatprep.subr.mxu0 0.0
        %271 = vmatpush1.msra.mxu0 0.0
        %272 = vmatprep.subr.mxu0 0.0
        %273 = vmatpush1.msra.mxu0 0.0
        %274 = vmatprep.subr.mxu0 0.0
        %275 = vmatpush1.msra.mxu0 0.0
        %276 = vmatprep.subr.mxu0 0.0
        %277 = vmatpush1.msra.mxu0 0.0
        %278 = vmatprep.subr.mxu0 0.0
        %279 = vmatpush1.msra.mxu0 0.0
        %280 = vmatprep.subr.mxu0 0.0
        %281 = vmatpush1.msra.mxu0 0.0
        %282 = vmatprep.subr.mxu0 0.0
        %283 = vmatpush1.msra.mxu0 0.0
        %284 = vmatprep.subr.mxu0 0.0
        %285 = vmatpush1.msra.mxu0 0.0
        %286 = vmatprep.subr.mxu0 0.0
        %287 = vmatpush1.msra.mxu0 0.0
        %288 = vmatprep.subr.mxu0 0.0
        %289 = vmatpush1.msra.mxu0 0.0
        %290 = vmatprep.subr.mxu0 0.0
        %291 = vmatpush1.msra.mxu0 0.0
        %292 = vmatprep.subr.mxu0 0.0
        %293 = vmatpush1.msra.mxu0 0.0
        %294 = vmatprep.subr.mxu0 0.0
        %295 = vmatpush1.msra.mxu0 0.0
        %296 = vmatprep.subr.mxu0 0.0
        %297 = vmatpush1.msra.mxu0 0.0
        %298 = vmatprep.subr.mxu0 0.0
        %299 = vmatpush1.msra.mxu0 0.0
        %300 = vmatprep.subr.mxu0 0.0
        %301 = vmatpush1.msra.mxu0 0.0
        %302 = vmatprep.subr.mxu0 0.0
        %303 = vmatpush1.msra.mxu0 0.0
        %304 = vmatprep.subr.mxu0 0.0
        %305 = vmatpush1.msra.mxu0 0.0
        %306 = vmatprep.subr.mxu0 0.0
        %307 = vmatpush1.msra.mxu0 0.0
        %308 = vmatprep.subr.mxu0 0.0
        %309 = vmatpush1.msra.mxu0 0.0
        %310 = vmatprep.subr.mxu0 0.0
        %311 = vmatpush1.msra.mxu0 0.0
        %312 = vmatprep.subr.mxu0 0.0
        %313 = vmatpush1.msra.mxu0 0.0
        %314 = vmatprep.subr.mxu0 0.0
        %315 = vmatpush1.msra.mxu0 0.0
        %316 = vmatprep.subr.mxu0 0.0
        %317 = vmatpush1.msra.mxu0 0.0
        %318 = vmatprep.subr.mxu0 0.0
        %319 = vmatpush1.msra.mxu0 0.0
        %320 = vmatprep.subr.mxu0 0.0
        %321 = vmatpush1.msra.mxu0 0.0
        %322 = vmatprep.subr.mxu0 0.0
        %323 = vmatpush1.msra.mxu0 0.0
        %324 = vmatprep.mubr.f32.mxu0 0.0
        %325 = vmatmul.mubr.f32.gmra.mrb[0].mxu0 %v255
        %v326 = vpop.f32.mrb[0].mxu0
        %v327 = vadd.f32 0.0, %v326
        %v328 = vpop.f32.mrb[0].mxu0
        %329 = vmatprep.mubr.f32.mxu0 0.0
        %330 = vmatmul.mubr.f32.gmra.mrb[0].mxu0 %v258
        %v331 = vpop.f32.mrb[0].mxu0
        %v332 = vadd.f32 0.0, %v331
        %v333 = vpop.f32.mrb[0].mxu0
        %334 = vdwg.mxu0
        %v335 = vadd.f32 %v243, %v253
        %v336 = vadd.f32 %v246, %v253
        %v337 = vmul.f32 %v327, 2.0
        %v338 = vmul.f32 %v332, 2.0
        %v339 = vsub.f32 %v335, %v337
        %v340 = vsub.f32 %v336, %v338
        %v341 = vmax.f32 %v339, 0.0
        %v342 = vmax.f32 %v340, 0.0
        %v343 = vstv %s234
        %v344 = vmul.f32 %v341, %v343
        %v345 = vmul.f32 %v342, %v343
        %v346 = vmul.f32 %v344, -10.0
        %v347 = vmul.f32 %v345, -10.0
        %v348 = vlaneseq
        %v349 = vshrl.u32 %v348, 7
        %v350 = vadd.s32 %v349, 8
        %v351 = vlaneseq
        %v352 = vand.u32 %v351, 127
        %vm353 = vcmp.lt.s32.totalorder %v349, 12
        %vm354 = vcmp.lt.s32.totalorder %v350, 12
        %vm355 = vcmp.lt.s32.totalorder %v352, 16
        %vm356 = vmand %vm353, %vm355
        %vm357 = vmand %vm354, %vm355
        %v358 = vsel %vm356, %v346, -1e+30
        %v359 = vsel %vm357, %v347, -1e+30
        // While loop
        $region29: #{tpu_custom_call.1} parent=27 // loop_pre_header
          _
        $region30: #{tpu_custom_call.1} parent=27 // loop_header
          %s361 = sphi 0, %s449
          %v362 = vphi 0.0, %v400
          %v363 = vphi 0.0, %v401
          %v364 = vphi 0.0, %v431
          %s365 = sphi inf, %s448
          %p366 = scmp.lt.s32.totalorder %s361, 100
          %p367 = scmp.ge.f32.partialorder %s365, 0.01
          %p368 = pnand %p366, %p367
          %p369 = pneg %p368
        $region31: #{tpu_custom_call.1} parent=27 // loop_header_branch
          %371 = sbr.rel (%p368) target = $region35
        $region32: #{tpu_custom_call.1} parent=27 // loop_body
          %v372 = vadd.f32 %v362, %v364
          %v373 = vadd.f32 %v363, %v364
          %v374 = vadd.f32 %v358, %v372
          %v375 = vadd.f32 %v359, %v373
          %376 = vmax.xlane.f32.xlu0 %v374
          %v377 = vpop.xlane.xlu0 %376
          %378 = vmax.xlane.f32.xlu0 %v375
          %v379 = vpop.xlane.xlu0 %378
          %v380 = vsub.f32 %v374, %v377
          %v381 = vsub.f32 %v375, %v379
          %v382 = vmul.f32 %v380, 1.442695
          %v383 = vpow.pop %v382
          %v384 = vmul.f32 %v381, 1.442695
          %v385 = vpow.pop %v384
          %386 = vadd.xlane.f32.xlu0 %v383
          %v387 = vpop.xlane.xlu0 %386
          %388 = vadd.xlane.f32.xlu0 %v385
          %v389 = vpop.xlane.xlu0 %388
          %v390 = vlog2.pop %v387
          %v391 = vmul.f32 %v390, 0.6931472
          %v392 = vlog2.pop %v389
          %v393 = vmul.f32 %v392, 0.6931472
          %v394 = vadd.f32 %v377, %v391
          %v395 = vadd.f32 %v379, %v393
          %v396 = vsub.f32 -2.4849064, %v394
          %v397 = vsub.f32 -2.4849064, %v395
          %v398 = vadd.f32 %v396, %v362
          %v399 = vadd.f32 %v397, %v363
          %v400 = vsel %vm353, %v398, 0.0
          %v401 = vsel %vm354, %v399, 0.0
          %v402 = vadd.f32 %v400, %v364
          %v403 = vadd.f32 %v401, %v364
          %v404 = vadd.f32 %v358, %v402
          %v405 = vadd.f32 %v359, %v403
          %v406 = vmax.f32 %v404, %v405
          %v407 = vrot.slane %v406, 4
          %v408 = vmax.f32 %v406, %v407
          %v409 = vrot.slane %v408, 2
          %v410 = vmax.f32 %v408, %v409
          %v411 = vrot.slane %v410, 1
          %v412 = vmax.f32 %v410, %v411
          %v413 = vsub.f32 %v404, %v412
          %v414 = vsub.f32 %v405, %v412
          %v415 = vmul.f32 %v413, 1.442695
          %v416 = vpow.pop %v415
          %v417 = vmul.f32 %v414, 1.442695
          %v418 = vpow.pop %v417
          %v419 = vadd.f32 %v416, %v418
          %v420 = vrot.slane %v419, 4
          %v421 = vadd.f32 %v419, %v420
          %v422 = vrot.slane %v421, 2
          %v423 = vadd.f32 %v421, %v422
          %v424 = vrot.slane %v423, 1
          %v425 = vadd.f32 %v423, %v424
          %v426 = vlog2.pop %v425
          %v427 = vmul.f32 %v426, 0.6931472
          %v428 = vadd.f32 %v412, %v427
          %v429 = vsub.f32 -2.7725885, %v428
          %v430 = vadd.f32 %v429, %v364
          %v431 = vsel %vm355, %v430, 0.0
          %v432 = vsub.f32 %v400, %v362
          %v433 = vsub.f32 %v401, %v363
          %v434 = vand.u32 2147483647, %v432
          %v435 = vand.u32 2147483647, %v433
          %vm436 = vcmask 7168
          %v437 = vsel %vm436, %v434, 0.0
          %v438 = vsel %vm436, %v435, 0.0
          %v439 = vadd.f32 %v437, %v438
          %440 = vadd.xlane.f32.xlu0 %v439
          %v441 = vpop.xlane.xlu0 %440
          %v442 = vrot.slane %v441, 4
          %v443 = vadd.f32 %v441, %v442
          %v444 = vrot.slane %v443, 2
          %v445 = vadd.f32 %v443, %v444
          %v446 = vrot.slane %v445, 1
          %v447 = vadd.f32 %v445, %v446
          %s448 = vtos %v447
          %s449 = sadd.s32 %s361, 1
        $region33: #{tpu_custom_call.1} parent=27 // loop_footer
          _
        $region34: #{tpu_custom_call.1} parent=27 // loop_footer_branch
          %360 = sbr.rel target = $region30
        $region35: #{tpu_custom_call.1} parent=27 // loop_exit
          _
        %v450 = vadd.f32 %v362, %v364
        %v451 = vadd.f32 %v363, %v364
        %v452 = vadd.f32 %v358, %v450
        %v453 = vadd.f32 %v359, %v451
        %v454 = vmul.f32 %v452, 1.442695
        %v455 = vpow.pop %v454
        %v456 = vmul.f32 %v453, 1.442695
        %v457 = vpow.pop %v456
        %v458 = vmul.f32 %v455, %v344
        %v459 = vmul.f32 %v457, %v345
        %460 = vadd.xlane.f32.xlu0 %v458
        %v461 = vpop.xlane.xlu0 %460
        %462 = vadd.xlane.f32.xlu0 %v459
        %v463 = vpop.xlane.xlu0 %462
        %v464 = vadd.f32 %v461, %v463
        %v465 = vrot.slane %v464, 4
        %v466 = vadd.f32 %v464, %v465
        %v467 = vrot.slane %v466, 2
        %v468 = vadd.f32 %v466, %v467
        %v469 = vrot.slane %v468, 1
        %v470 = vadd.f32 %v468, %v469
        %vm471 = vcmask 0
        %472 = vst.msk [vmem:[%s233] sm:$0x1] %vm471, %v470
        %473 = vst [vmem:[%s214] sm:$0xff] %v455
        %474 = vst [vmem:[%s214 + $0x8] sm:$0xff] %v457
        %475 = vst [vmem:[%s221] sm:$0xff] %v344
        %476 = vst [vmem:[%s221 + $0x8] sm:$0xff] %v345
        %p477 = scmp.lt.s32.totalorder %s24, 1
        %s478 = scalar_select %p477, %s24, 1
        %s479 = scalar_lea.vmem %s3, %s478
        %s480 = sand.u32 %s110, 1
        %s481 = scalar_lea.sflag [#allocation5], %s480
        %s482 = sand.u32 %s110, 1
        %s483 = smul.addr %s482, 16
        %s484 = scalar_lea.vmem [#allocation4], %s483
        %s485 = sand.u32 %s136, 1
        %s486 = scalar_lea.sflag [#allocation7], %s485
        %s487 = sand.u32 %s136, 1
        %s488 = smul.addr %s487, 16
        %s489 = scalar_lea.vmem [#allocation6], %s488
        // Predicated region
        $region36: #{tpu_custom_call.1} parent=27 // pred_check
          %p490 = pneg %p94
        $region37: #{tpu_custom_call.1} parent=27 // pred_check_branch
          %492 = sbr.rel (%p490) target = $region39
        $region38: #{tpu_custom_call.1} parent=27 // pred_region
          _
        $region39: #{tpu_custom_call.1} parent=27 // pred_fallthru
          _
        // Predicated region
        $region40: #{tpu_custom_call.1} parent=27 // pred_check
          %p493 = pneg %p120
        $region41: #{tpu_custom_call.1} parent=27 // pred_check_branch
          %495 = sbr.rel (%p493) target = $region43
        $region42: #{tpu_custom_call.1} parent=27 // pred_region
          %s497 = ssub.s32 256, 256
          %498 = vsyncadd %s481, %s497
          %s499 = smul.addr %s24, 2
          %s500 = smul.addr %s499, 128
          %s501 = scalar_lea.hbm %s4, %s500
          %s502 = sshll.u32 %s484, 4
          %s503 = int_to_ptr.vmem [resolvable:$true] %s502
          %508 = dma.vmem_to_hbm [thread:$0]  %s503, 256, %s501, %s481, 128, 128, 8
        $region43: #{tpu_custom_call.1} parent=27 // pred_fallthru
          _
        // Predicated region
        $region44: #{tpu_custom_call.1} parent=27 // pred_check
          %p509 = pneg %p146
        $region45: #{tpu_custom_call.1} parent=27 // pred_check_branch
          %511 = sbr.rel (%p509) target = $region47
        $region46: #{tpu_custom_call.1} parent=27 // pred_region
          %s513 = ssub.s32 256, 256
          %514 = vsyncadd %s486, %s513
          %s515 = smul.addr %s24, 2
          %s516 = smul.addr %s515, 128
          %s517 = scalar_lea.hbm %s5, %s516
          %s518 = sshll.u32 %s489, 4
          %s519 = int_to_ptr.vmem [resolvable:$true] %s518
          %524 = dma.vmem_to_hbm [thread:$0]  %s519, 256, %s517, %s486, 128, 128, 8
        $region47: #{tpu_custom_call.1} parent=27 // pred_fallthru
          _
      $region28: #{tpu_custom_call.1} parent=5 // pred_fallthru
        _
      %p525 = scmp.le.s32.totalorder 2, %s19
      // Predicated region
      $region48: #{tpu_custom_call.1} parent=5 // pred_check
        %p526 = pneg %p525
      $region49: #{tpu_custom_call.1} parent=5 // pred_check_branch
        %528 = sbr.rel (%p526) target = $region51
      $region50: #{tpu_custom_call.1} parent=5 // pred_region
        %s529 = ssub.s32 %s19, 2
        // Predicated region
        $region52: #{tpu_custom_call.1} parent=50 // pred_check
          %p530 = pneg %p100
        $region53: #{tpu_custom_call.1} parent=50 // pred_check_branch
          %532 = sbr.rel (%p530) target = $region55
        $region54: #{tpu_custom_call.1} parent=50 // pred_region
          %p533 = scmp.lt.s32.totalorder %s25, 1
          %s534 = scalar_select %p533, %s25, 1
          %s535 = scalar_lea.vmem %s3, %s534
        $region55: #{tpu_custom_call.1} parent=50 // pred_fallthru
          _
        // Predicated region
        $region56: #{tpu_custom_call.1} parent=50 // pred_check
          %p536 = pneg %p126
        $region57: #{tpu_custom_call.1} parent=50 // pred_check_branch
          %538 = sbr.rel (%p536) target = $region59
        $region58: #{tpu_custom_call.1} parent=50 // pred_region
          %s539 = sand.u32 %s111, 1
          %s540 = scalar_lea.sflag [#allocation5], %s539
          %s541 = sand.u32 %s111, 1
          %s542 = smul.addr %s541, 16
          %s543 = scalar_lea.vmem [#allocation4], %s542
          %544 = dma.done %s540, 256
        $region59: #{tpu_custom_call.1} parent=50 // pred_fallthru
          _
        // Predicated region
        $region60: #{tpu_custom_call.1} parent=50 // pred_check
          %p545 = pneg %p152
        $region61: #{tpu_custom_call.1} parent=50 // pred_check_branch
          %547 = sbr.rel (%p545) target = $region63
        $region62: #{tpu_custom_call.1} parent=50 // pred_region
          %s548 = sand.u32 %s137, 1
          %s549 = scalar_lea.sflag [#allocation7], %s548
          %s550 = sand.u32 %s137, 1
          %s551 = smul.addr %s550, 16
          %s552 = scalar_lea.vmem [#allocation6], %s551
          %553 = dma.done %s549, 256
        $region63: #{tpu_custom_call.1} parent=50 // pred_fallthru
          _
      $region51: #{tpu_custom_call.1} parent=5 // pred_fallthru
        _
    $region6: #{tpu_custom_call.1} parent=1 // loop_footer
      %s23 = sadd.s32 1, %s19
    $region7: #{tpu_custom_call.1} parent=1 // loop_footer_branch
      %18 = sbr.rel target = $region3
    $region8: #{tpu_custom_call.1} parent=1 // loop_exit
      _
    %554 = vsyncpa [#allocation5], 1
    %s555 = scalar_lea.sflag [#allocation5], 1
    %556 = vsyncpa %s555, 1
    %557 = vsyncpa [#allocation7], 1
    %s558 = scalar_lea.sflag [#allocation7], 1
    %559 = vsyncpa %s558, 1

</llo_original>
